<compile_context>
chip_gen: v6e
topology: v6e:2x2x1
jax: 0.10.0
libtpu: 0.0.40
codegen_flags: <defaults>
</compile_context>

<pallas_src>
import functools

import jax
import jax.numpy as jnp
from jax.experimental import pallas as pl
from jax.experimental.pallas import tpu as pltpu


# ----------------------------- kernels --------------------------------------


def _classwise_pool_lane_kernel(x_ref, o_ref, *, num_maps, hw):
    # x_ref: (tile_rows, num_maps * hw)  -- num_maps lane-aligned slabs of hw
    # o_ref: (tile_rows, hw)
    inv = 1.0 / float(num_maps)  # exact for power-of-two num_maps (e.g. 4)
    acc = x_ref[:, 0:hw].astype(jnp.float32)
    for k in range(1, num_maps):  # static unrolled, lane-aligned slice adds
        acc = acc + x_ref[:, k * hw:(k + 1) * hw].astype(jnp.float32)
    o_ref[...] = (acc * inv).astype(o_ref.dtype)


def _classwise_pool_sublane_kernel(x_ref, o_ref, *, num_maps):
    # x_ref: (tile_rows, num_maps, hw_tile)
    # o_ref: (tile_rows, hw_tile)
    inv = 1.0 / float(num_maps)
    xv = x_ref[...].astype(jnp.float32)
    acc = xv[:, 0, :]
    for k in range(1, num_maps):  # static unrolled adds over the num_maps axis
        acc = acc + xv[:, k, :]
    o_ref[...] = (acc * inv).astype(o_ref.dtype)


# --------------------------- tiling policy -----------------------------------


def _tpu_tuning():
    """Per-generation (target input-block bytes, vmem_limit_bytes, #TensorCores)."""
    target = 4 << 20          # safe under v5e's 16 MiB default scoped VMEM
    vmem_limit = None
    num_tc = 1
    try:
        kind = jax.devices()[0].device_kind.lower()
    except Exception:
        kind = ""
    if "v6" in kind:
        # 2*(8 MiB in + 2 MiB out) = 20 MiB, under the 32 MiB default limit.
        target = 8 << 20
    elif ("v7" in kind) or ("tpu7" in kind):
        # 2*(16 MiB in + 4 MiB out) = 40 MiB; raise the scoped limit (64 MiB VMEM).
        target = 16 << 20
        vmem_limit = 48 << 20
        num_tc = 2
    return target, vmem_limit, num_tc


def _choose_tile_rows(rows, row_bytes, align, target_bytes, num_tc):
    """Row tile: multiple of `align`, input block <= target_bytes, and on
    multi-TensorCore chips small enough that the grid has >= num_tc steps.
    The grid uses cdiv, so the last block may be ragged (masked writeback)."""
    if rows <= align:
        return rows
    cap = int(target_bytes // max(1, row_bytes))
    cap = max(align, (cap // align) * align)
    if num_tc > 1:
        per_core = -(-rows // num_tc)                     # ceil(rows / num_tc)
        per_core = max(align, -(-per_core // align) * align)
        cap = min(cap, per_core)
    if cap >= rows:
        return rows
    return cap


def _choose_hw_tile(hw, num_maps, itemsize, align, target_bytes):
    """Lane tile for the (rows, num_maps, HW) fallback layout: full HW when a
    minimal (align, num_maps, HW) block fits, otherwise a multiple of 128."""
    if hw <= 128 or align * num_maps * hw * itemsize <= target_bytes:
        return hw
    max_hw = target_bytes // (align * num_maps * itemsize)
    return max(128, (int(max_hw) // 128) * 128)


# ------------------------------ wrapper ---------------------------------------


def classwise_pool(x, num_maps=4):
    """Pallas implementation of ClassWisePoolFunction.forward.

    x: (B, C, H, W) with C % num_maps == 0.
    Returns (B, C // num_maps, H, W), same dtype as x.
    """
    B, C, H, W = x.shape
    assert C % num_maps == 0, (
        "The number of channels has to be a multiple of the number of maps per class"
    )
    num_outputs = C // num_maps
    HW = H * W
    rows = B * num_outputs

    itemsize = jnp.dtype(x.dtype).itemsize
    align = max(8, 32 // itemsize)                 # 8 f32, 16 bf16, 32 int8/fp8
    target_bytes, vmem_limit, num_tc = _tpu_tuning()

    lane_row_bytes = num_maps * HW * itemsize
    use_lane_folded = (HW % 128 == 0) and (
        min(rows, align) * lane_row_bytes <= target_bytes
    )

    if use_lane_folded:
        # ------- fast path: (rows, num_maps*HW), lane-aligned slabs -------
        cols = num_maps * HW
        x2 = x.reshape(rows, cols)
        tile_rows = _choose_tile_rows(rows, lane_row_bytes, align, target_bytes, num_tc)
        grid = (pl.cdiv(rows, tile_rows),)
        kernel = functools.partial(
            _classwise_pool_lane_kernel, num_maps=num_maps, hw=HW
        )
        out = pl.pallas_call(
            kernel,
            out_shape=jax.ShapeDtypeStruct((rows, HW), x.dtype),
            grid_spec=pltpu.PrefetchScalarGridSpec(
                num_scalar_prefetch=0,
                grid=grid,
                in_specs=[pl.BlockSpec((tile_rows, cols), lambda r: (r, 0))],
                out_specs=pl.BlockSpec((tile_rows, HW), lambda r: (r, 0)),
            ),
            compiler_params=pltpu.CompilerParams(
                dimension_semantics=("parallel",),
                vmem_limit_bytes=vmem_limit,
            ),
            cost_estimate=pl.CostEstimate(
                flops=rows * cols,
                transcendentals=0,
                bytes_accessed=(rows * cols + rows * HW) * itemsize,
            ),
        )(x2)
    else:
        # ------- fallback: (rows, num_maps, HW) with HW lane tiling -------
        x3 = x.reshape(rows, num_maps, HW)
        hw_tile = _choose_hw_tile(HW, num_maps, itemsize, align, target_bytes)
        row_bytes = num_maps * hw_tile * itemsize
        tile_rows = _choose_tile_rows(rows, row_bytes, align, target_bytes, num_tc)
        grid = (pl.cdiv(rows, tile_rows), pl.cdiv(HW, hw_tile))
        kernel = functools.partial(_classwise_pool_sublane_kernel, num_maps=num_maps)
        out = pl.pallas_call(
            kernel,
            out_shape=jax.ShapeDtypeStruct((rows, HW), x.dtype),
            grid_spec=pltpu.PrefetchScalarGridSpec(
                num_scalar_prefetch=0,
                grid=grid,
                in_specs=[
                    pl.BlockSpec(
                        (tile_rows, num_maps, hw_tile), lambda r, c: (r, 0, c)
                    )
                ],
                out_specs=pl.BlockSpec((tile_rows, hw_tile), lambda r, c: (r, c)),
            ),
            compiler_params=pltpu.CompilerParams(
                dimension_semantics=("parallel", "parallel"),
                vmem_limit_bytes=vmem_limit,
            ),
            cost_estimate=pl.CostEstimate(
                flops=rows * num_maps * HW,
                transcendentals=0,
                bytes_accessed=(rows * num_maps * HW + rows * HW) * itemsize,
            ),
        )(x3)

    return out.reshape(B, num_outputs, H, W)


if __name__ == "__main__":
    # Small deterministic example consistent with the module:
    # num_maps = 4 (hardcoded in the PyTorch forward), num_classes = 2,
    # so channels = 8, spatial = 16x16, batch = 2.
    key = jax.random.PRNGKey(0)
    B, C, H, W = 2, 8, 16, 16
    num_maps = 4
    x = jax.random.normal(key, (B, C, H, W), dtype=jnp.float32)

    y = jax.block_until_ready(classwise_pool(x, num_maps=num_maps))
    y_ref = x.reshape(B, C // num_maps, num_maps, H, W).sum(axis=2) / num_maps
    assert y.shape == (B, C // num_maps, H, W), y.shape
    assert jnp.allclose(y, y_ref, atol=1e-6, rtol=1e-6)

    # Also exercise the fallback path (HW = 7*7 = 49, not a multiple of 128).
    x2 = jax.random.normal(jax.random.PRNGKey(0), (2, 8, 7, 7), dtype=jnp.float32)
    y2 = jax.block_until_ready(classwise_pool(x2, num_maps=num_maps))
    y2_ref = x2.reshape(2, 2, num_maps, 7, 7).sum(axis=2) / num_maps
    assert jnp.allclose(y2, y2_ref, atol=1e-6, rtol=1e-6)

    print("KERNEL_OK")
</pallas_src>

<mosaic_0001>
module attributes {stable_mosaic.version = 11 : i64} {
  func.func @_classwise_pool_lane_kernel(%arg0: i32, %arg1: memref<4x1024xf32, #tpu.memory_space<vmem>>, %arg2: memref<4x256xf32, #tpu.memory_space<vmem>>) attributes {dimension_semantics = [#tpu.dimension_semantics<parallel>], iteration_bounds = array<i64: 1>, scalar_prefetch = 0 : i64, scratch_operands = 0 : i64, tpu.core_type = #tpu.core_type<tc>, window_params = [{transform_indices = @transform_0, window_bounds = array<i64: 4, 1024>}, {transform_indices = @transform_1, window_bounds = array<i64: 4, 256>}]} {
    %c0 = arith.constant 0 : index
    %c0_0 = arith.constant 0 : index
    %0 = vector.load %arg1[%c0, %c0_0] : memref<4x1024xf32, #tpu.memory_space<vmem>>, vector<4x256xf32>
    %c0_1 = arith.constant 0 : index
    %c256 = arith.constant 256 : index
    %1 = vector.load %arg1[%c0_1, %c256] : memref<4x1024xf32, #tpu.memory_space<vmem>>, vector<4x256xf32>
    %2 = arith.addf %0, %1 : vector<4x256xf32>
    %c0_2 = arith.constant 0 : index
    %c512 = arith.constant 512 : index
    %3 = vector.load %arg1[%c0_2, %c512] : memref<4x1024xf32, #tpu.memory_space<vmem>>, vector<4x256xf32>
    %4 = arith.addf %2, %3 : vector<4x256xf32>
    %c0_3 = arith.constant 0 : index
    %c768 = arith.constant 768 : index
    %5 = vector.load %arg1[%c0_3, %c768] : memref<4x1024xf32, #tpu.memory_space<vmem>>, vector<4x256xf32>
    %6 = arith.addf %4, %5 : vector<4x256xf32>
    %cst = arith.constant 2.500000e-01 : f32
    %7 = vector.broadcast %cst : f32 to vector<4x256xf32>
    %8 = arith.mulf %6, %7 : vector<4x256xf32>
    %c0_4 = arith.constant 0 : index
    %c0_5 = arith.constant 0 : index
    %9 = vector.load %arg2[%c0_4, %c0_5] : memref<4x256xf32, #tpu.memory_space<vmem>>, vector<4x256xf32>
    tpu.vector_store %arg2[%c0_4, %c0_5], %8 {strides = array<i32>} : memref<4x256xf32, #tpu.memory_space<vmem>>, vector<4x256xf32>,
    return
  }
  func.func @transform_0(%arg0: i32) -> (i32, i32) {
    %c0_i32 = arith.constant 0 : i32
    %c0_i32_0 = arith.constant 0 : i32
    return %arg0, %c0_i32 : i32, i32
  }
  func.func @transform_1(%arg0: i32) -> (i32, i32) {
    %c0_i32 = arith.constant 0 : i32
    %c0_i32_0 = arith.constant 0 : i32
    return %arg0, %c0_i32 : i32, i32
  }
}

</mosaic_0001>

<llo_original>
// kernel: tpu_custom_call.1
$region0: #{tpu_custom_call.1}
  #allocation0 [shape = 'u32[]', space=smem, size = 0x4, offset = 0x4, fixed_abs, tag = 'smem constant byte address 0x4 - core index']
  #allocation1 [shape = 'u32[144,128]{1,0:T(1,128)}', space=vmem, size = 0x12000, scoped, tag = 'internal scratch']
  %s0 = inlined_call_operand.hbm [shape: f32[4,1024], index: 0, kind: input, shape index: {}]
  %s1 = inlined_call_operand.hbm [shape: f32[4,256], index: 1, kind: output, shape index: {}]
  %s2 = sld [smem:[#allocation0]]
  $region18: #{tpu_custom_call.1} parent=0
    _
  %s4 = ssub.s32 1, %s2
  %s5 = scalar_select 0, %s4, %s2
  $region1: #{tpu_custom_call.1} parent=0
    #allocation2 [shape = 'u8[16384]{0}', space=vmem, size = 0x4000, scoped, tag = 'input window, operand 0, single buffered']
    #allocation3 [shape = 's32[1]{0}', space=sflag, size = 0x4, scoped, tag = 'scoped memory for tpu_custom_call.1']
    #allocation4 [shape = 's32[1]{0}', space=sflag, size = 0x4, scoped, tag = 'scoped memory for tpu_custom_call.1']
    #allocation5 [shape = 'u8[4096]{0}', space=vmem, size = 0x1000, scoped, tag = 'output window, operand 0, single buffered']
    %6 = vsyncpa [#allocation3], 0
    %7 = vsyncpa [#allocation4], 0
    // Predicated region
    $region2: #{tpu_custom_call.1} parent=1 // pred_check
      _
    $region3: #{tpu_custom_call.1} parent=1 // pred_check_branch
      %9 = sbr.rel (0) target = $region5
    $region4: #{tpu_custom_call.1} parent=1 // pred_region
      %s11 = ssub.s32 512, 512
      %12 = vsyncadd [#allocation3], %s11
      %s14 = sshll.u32 [#allocation2], 4
      %s15 = int_to_ptr.vmem [resolvable:$true] %s14
      %17 = dma.hbm_to_vmem [thread:$0]  %s0, 512, %s15, [#allocation3]
    $region5: #{tpu_custom_call.1} parent=1 // pred_fallthru
      _
    // Predicated region
    $region6: #{tpu_custom_call.1} parent=1 // pred_check
      _
    $region7: #{tpu_custom_call.1} parent=1 // pred_check_branch
      %19 = sbr.rel (0) target = $region9
    $region8: #{tpu_custom_call.1} parent=1 // pred_region
      %20 = dma.done [#allocation3], 512
    $region9: #{tpu_custom_call.1} parent=1 // pred_fallthru
      _
    %v21 = vld [vmem:[#allocation2] sm:$0xff]
    %v22 = vld [vmem:[#allocation2 + $0x8] sm:$0xff]
    %v23 = vadd.f32 %v21, %v22
    %v24 = vld [vmem:[#allocation2 + $0x10] sm:$0xff]
    %v25 = vadd.f32 %v23, %v24
    %v26 = vld [vmem:[#allocation2 + $0x18] sm:$0xff]
    %v27 = vadd.f32 %v25, %v26
    %v28 = vmul.f32 %v27, 0.25
    %29 = vst [vmem:[#allocation5] sm:$0xff] %v28
    // Predicated region
    $region10: #{tpu_custom_call.1} parent=1 // pred_check
      _
    $region11: #{tpu_custom_call.1} parent=1 // pred_check_branch
      %31 = sbr.rel (0) target = $region13
    $region12: #{tpu_custom_call.1} parent=1 // pred_region
      %s33 = ssub.s32 128, 128
      %34 = vsyncadd [#allocation4], %s33
      %s36 = sshll.u32 [#allocation5], 4
      %s37 = int_to_ptr.vmem [resolvable:$true] %s36
      %39 = dma.vmem_to_hbm [thread:$0]  %s37, 128, %s1, [#allocation4]
    $region13: #{tpu_custom_call.1} parent=1 // pred_fallthru
      _
    // Predicated region
    $region14: #{tpu_custom_call.1} parent=1 // pred_check
      _
    $region15: #{tpu_custom_call.1} parent=1 // pred_check_branch
      %41 = sbr.rel (0) target = $region17
    $region16: #{tpu_custom_call.1} parent=1 // pred_region
      %42 = dma.done [#allocation4], 128
    $region17: #{tpu_custom_call.1} parent=1 // pred_fallthru
      _
    %43 = vsyncpa [#allocation3], 1
    %44 = vsyncpa [#allocation4], 1

</llo_original>
